<compile_context>
chip_gen: v7x
topology: tpu7x:2x2x1
jax: 0.10.0
libtpu: 0.0.40
codegen_flags: <defaults>
</compile_context>

<pallas_src>
import math

import jax
import jax.numpy as jnp
import numpy as np
from jax.experimental import pallas as pl
from jax.experimental.pallas import tpu as pltpu

_EPS = 1e-5  # torch.nn.InstanceNorm2d default eps


# --------------------------------------------------------------------------- #
# Helpers
# --------------------------------------------------------------------------- #
def _round_up(x, m):
    return (x + m - 1) // m * m


def _pad_last2(x, r, c):
    pr, pc = r - x.shape[-2], c - x.shape[-1]
    if pr == 0 and pc == 0:
        return x
    pad = [(0, 0)] * (x.ndim - 2) + [(0, pr), (0, pc)]
    return jnp.pad(x, pad)


def _vmem_capacity_bytes(default=64 << 20):
    """Per-core VMEM capacity; conservative fallback if the query fails."""
    try:
        info = pltpu.get_tpu_info()
        cap = getattr(info, "vmem_capacity_bytes", None)
        return int(cap) if cap else default
    except Exception:
        return default


def _choose_block_n(n, io_bytes_per_sample, fixed_bytes, vmem_cap):
    """Largest divisor of n whose double-buffered I/O blocks fit the budget."""
    budget = int(0.55 * vmem_cap)
    divisors = [d for d in range(1, n + 1) if n % d == 0]
    feasible = [d for d in divisors
                if fixed_bytes + 2 * d * io_bytes_per_sample <= budget] or [1]
    # ~64 MiB/TC parts (v7x) split the grid across two TensorCores: keep the
    # number of grid steps even so neither core idles on the tail step.
    if vmem_cap <= (96 << 20) and n >= 2:
        even = [d for d in feasible if (n // d) % 2 == 0]
        if even:
            return max(even)
    return max(feasible)


# --------------------------------------------------------------------------- #
# Kernel
# --------------------------------------------------------------------------- #
def _make_kernel(ci_real, hw_real, cip, hwp, block_n):
    inv_sqrt_ci = 1.0 / math.sqrt(ci_real)
    need_mask = hwp != hw_real

    def _instance_norm(x, gamma, beta):
        # Single-pass mean/var over the real HW columns (padded columns are 0).
        s1 = jnp.sum(x, axis=-1, keepdims=True)
        s2 = jnp.sum(x * x, axis=-1, keepdims=True)
        mu = s1 * (1.0 / hw_real)
        var = jnp.maximum(s2 * (1.0 / hw_real) - mu * mu, 0.0)
        inv = jax.lax.rsqrt(var + _EPS)
        return (x - mu) * (inv * gamma) + beta

    def kernel(vis_ref, lan_ref, w_qm_ref, w_o_ref, w_kv_ref, vecs_ref, out_ref):
        # Grid-invariant parameters, already bf16 (weights) / f32 (vectors).
        w_qm = w_qm_ref[...]          # [2*Cip, Cip] = [Wq ; Wm]
        w_o = w_o_ref[...]            # [Cip, Cip]
        w_kv = w_kv_ref[...]          # [2*Cip, Ct]  = [Wk ; Ww@Wv]
        vecs = vecs_ref[...]          # [Cip, 8]

        b_m = vecs[:, 0:1]
        b_k = vecs[:, 1:2]
        b_wv = vecs[:, 2:3]           # = Ww @ b_v
        b_o = vecs[:, 3:4]
        gam_q, bet_q = vecs[:, 4:5], vecs[:, 5:6]
        gam_w, bet_w = vecs[:, 6:7], vecs[:, 7:8]

        if need_mask:
            col_mask = jax.lax.broadcasted_iota(jnp.int32, (1, hwp), 1) < hw_real

        def sample_body(i, carry):
            vis = vis_ref[i]          # bf16 [Cip, HWp]
            lan = lan_ref[i]          # bf16 [Ct, T]

            # Fused language projection (Conv1d k=1): rows [Wk ; Ww@Wv].
            lkv = jnp.dot(w_kv, lan, preferred_element_type=jnp.float32)
            lk = lkv[:cip] + b_k                       # [Cip, T]
            wwlv = lkv[cip:] + b_wv                    # [Cip, T]  (= Ww @ Lv)

            # Fused visual projection (Conv2d 1x1): rows [Wq ; Wm].
            # b_q is dropped — it cancels in the InstanceNorm.
            qm = jnp.dot(w_qm, vis, preferred_element_type=jnp.float32)
            qn = _instance_norm(qm[:cip], gam_q, bet_q)          # [Cip, HWp]
            vo = jnp.maximum(qm[cip:] + b_m, 0.0)                # relu(Wm(vis))

            # scores[T, HWp] = Lk^T @ Vq  (transposed-LHS matmul; HW lane-dense)
            scores = jax.lax.dot_general(
                lk.astype(jnp.bfloat16), qn.astype(jnp.bfloat16),
                dimension_numbers=(((0,), (0,)), ((), ())),
                preferred_element_type=jnp.float32) * inv_sqrt_ci
            scores = scores - jnp.max(scores, axis=0, keepdims=True)
            e = jnp.exp(scores)
            attn = e * pl.reciprocal(jnp.sum(e, axis=0, keepdims=True),
                                     approx=True)                # [T, HWp]

            # Ww(G) = (Ww @ Lv) @ attn — the Ci^2·HW matmul on G is eliminated.
            # b_w is dropped (cancels in the InstanceNorm below).
            ww_g = jnp.dot(wwlv.astype(jnp.bfloat16), attn.astype(jnp.bfloat16),
                           preferred_element_type=jnp.float32)   # [Cip, HWp]
            if need_mask:
                ww_g = jnp.where(col_mask, ww_g, 0.0)
            gi = _instance_norm(ww_g, gam_w, bet_w)

            # out = relu(Wo(Vo * Gi) + b_o)
            out = jnp.dot(w_o, (vo * gi).astype(jnp.bfloat16),
                          preferred_element_type=jnp.float32) + b_o
            out_ref[i] = jnp.maximum(out, 0.0).astype(out_ref.dtype)
            return carry

        if block_n <= 2:
            for i in range(block_n):
                sample_body(i, 0)
        else:
            jax.lax.fori_loop(0, block_n, sample_body, 0)

    return kernel


# --------------------------------------------------------------------------- #
# Wrapper
# --------------------------------------------------------------------------- #
def pixel_attention(vis_feat, lan_feat, params, *, block_n=None):
    """vis_feat: [N, Ci, H, W]; lan_feat: [N, Ct, T] -> [N, Ci, H, W]."""
    N, Ci, H, W = vis_feat.shape
    _, Ct, T = lan_feat.shape
    HW = H * W
    Cip = _round_up(Ci, 8)
    HWp = _round_up(HW, 128)

    # Channels-first, lane-dense, bf16 inputs (pure reshape + pad, no transposes).
    vis = _pad_last2(vis_feat.reshape(N, Ci, HW), Cip, HWp).astype(jnp.bfloat16)
    lan = lan_feat.astype(jnp.bfloat16)

    # ---- parameter packing (PyTorch layout: weights [Cout, Cin], vectors [Cout])
    f32 = jnp.float32
    wq, wm, wo = (params[k].astype(f32) for k in ("wq", "wm", "wo"))
    wk, wv, ww = (params[k].astype(f32) for k in ("wk", "wv", "ww"))
    # Fold Ww into the value projection: Ww @ (Wv lan + b_v) = (Ww Wv) lan + Ww b_v.
    w_wv = ww @ wv                                   # [Ci, Ct]
    b_wv = ww @ params["bv"].astype(f32)             # [Ci]

    w_qm = jnp.concatenate([_pad_last2(wq, Cip, Cip),
                            _pad_last2(wm, Cip, Cip)], axis=0).astype(jnp.bfloat16)
    w_o = _pad_last2(wo, Cip, Cip).astype(jnp.bfloat16)
    w_kv = jnp.concatenate([_pad_last2(wk, Cip, Ct),
                            _pad_last2(w_wv, Cip, Ct)], axis=0).astype(jnp.bfloat16)

    def pad_v(v):
        return jnp.pad(v.astype(f32), (0, Cip - Ci))

    vecs = jnp.stack(
        [pad_v(params["bm"]), pad_v(params["bk"]), pad_v(b_wv), pad_v(params["bo"]),
         pad_v(params["gq"]), pad_v(params["betq"]),
         pad_v(params["gw"]), pad_v(params["betw"])], axis=1)     # [Cip, 8]

    # ---- VMEM-aware block sizing
    vmem_cap = _vmem_capacity_bytes()
    io_bytes = 2 * Cip * HWp + 2 * Ct * T + 4 * Cip * HWp   # bf16 vis + bf16 lan + f32 out
    tmp_bytes = HWp * (30 * Cip + 16 * T) + 64 * Cip * T    # per-sample f32 intermediates (rough)
    param_bytes = 2 * 2 * (3 * Cip * Cip + 2 * Cip * Ct) + 4 * Cip * 8

    if block_n is None:
        block_n = _choose_block_n(N, io_bytes, tmp_bytes + param_bytes, vmem_cap)
    assert N % block_n == 0, "block_n must divide the batch"
    grid = (N // block_n,)

    est = 2 * block_n * io_bytes + tmp_bytes + param_bytes
    vmem_limit = int(min(max(2 * est, 32 << 20), int(0.85 * vmem_cap)))

    # TODO(synk): for Ci*HW too large for one sample in VMEM (v7x 64 MiB), add an
    # HW-tile grid axis with partial-sum (s1/s2) instance-norm accumulators.

    def batch_spec(c, l):
        return pl.BlockSpec((block_n, c, l), lambda n: (n, 0, 0))

    def const_spec(shape):
        return pl.BlockSpec(shape, lambda n: (0, 0))

    kernel = _make_kernel(Ci, HW, Cip, HWp, block_n)

    out = pl.pallas_call(
        kernel,
        out_shape=jax.ShapeDtypeStruct((N, Cip, HWp), jnp.float32),
        grid=grid,
        in_specs=[
            batch_spec(Cip, HWp),         # vis (bf16)
            batch_spec(Ct, T),            # lan (bf16)
            const_spec((2 * Cip, Cip)),   # [Wq ; Wm]          (bf16)
            const_spec((Cip, Cip)),       # Wo                 (bf16)
            const_spec((2 * Cip, Ct)),    # [Wk ; Ww@Wv]       (bf16)
            const_spec((Cip, 8)),         # biases + norm affine params (f32)
        ],
        out_specs=batch_spec(Cip, HWp),
        compiler_params=pltpu.CompilerParams(
            dimension_semantics=("parallel",),
            vmem_limit_bytes=vmem_limit,
        ),
    )(vis, lan, w_qm, w_o, w_kv, vecs)

    return out[:, :Ci, :HW].reshape(N, Ci, H, W)


# --------------------------------------------------------------------------- #
# Synthetic params + pure-JAX reference
# --------------------------------------------------------------------------- #
def init_params(key, Ci, Ct):
    """Deterministic synthetic parameters in PyTorch layout ([Cout, Cin] weights)."""
    ks = jax.random.split(key, 16)
    s = 0.1
    return {
        "wk": jax.random.normal(ks[0], (Ci, Ct), jnp.float32) * s,
        "bk": jax.random.normal(ks[1], (Ci,), jnp.float32) * s,
        "wv": jax.random.normal(ks[2], (Ci, Ct), jnp.float32) * s,
        "bv": jax.random.normal(ks[3], (Ci,), jnp.float32) * s,
        "wq": jax.random.normal(ks[4], (Ci, Ci), jnp.float32) * s,
        "bq": jax.random.normal(ks[5], (Ci,), jnp.float32) * s,
        "ww": jax.random.normal(ks[6], (Ci, Ci), jnp.float32) * s,
        "bw": jax.random.normal(ks[7], (Ci,), jnp.float32) * s,
        "wm": jax.random.normal(ks[8], (Ci, Ci), jnp.float32) * s,
        "bm": jax.random.normal(ks[9], (Ci,), jnp.float32) * s,
        "wo": jax.random.normal(ks[10], (Ci, Ci), jnp.float32) * s,
        "bo": jax.random.normal(ks[11], (Ci,), jnp.float32) * s,
        "gq": 1.0 + jax.random.normal(ks[12], (Ci,), jnp.float32) * s,
        "betq": jax.random.normal(ks[13], (Ci,), jnp.float32) * s,
        "gw": 1.0 + jax.random.normal(ks[14], (Ci,), jnp.float32) * s,
        "betw": jax.random.normal(ks[15], (Ci,), jnp.float32) * s,
    }


def pixel_attention_ref(vis_feat, lan_feat, p):
    """Pure-JAX reference mirroring the PyTorch forward (for verification)."""
    N, Ci, H, W = vis_feat.shape
    HW = H * W
    vis = vis_feat.reshape(N, Ci, HW)
    lan = lan_feat

    def conv(x, w, b):  # x: [N, Cin, L]; w: [Cout, Cin]; b: [Cout]
        return jnp.einsum("oc,ncl->nol", w, x) + b[None, :, None]

    def inorm(x, g, b):  # x: [N, C, L]
        mu = jnp.mean(x, axis=2, keepdims=True)
        var = jnp.mean((x - mu) ** 2, axis=2, keepdims=True)
        return (x - mu) / jnp.sqrt(var + _EPS) * g[None, :, None] + b[None, :, None]

    lk = conv(lan, p["wk"], p["bk"])
    lv = conv(lan, p["wv"], p["bv"])
    vq = inorm(conv(vis, p["wq"], p["bq"]), p["gq"], p["betq"])
    scores = jnp.einsum("nch,nct->nht", vq, lk) / math.sqrt(Ci)
    attn = jax.nn.softmax(scores, axis=-1)
    g = jnp.einsum("nht,nct->nch", attn, lv)
    gi = inorm(conv(g, p["ww"], p["bw"]), p["gw"], p["betw"])
    vo = jax.nn.relu(conv(vis, p["wm"], p["bm"]))
    out = jax.nn.relu(conv(vo * gi, p["wo"], p["bo"]))
    return out.reshape(N, Ci, H, W)


if __name__ == "__main__":
    N, Ci, H, W = 2, 8, 16, 16
    Ct, T = 16, 8

    key = jax.random.PRNGKey(0)
    k_vis, k_lan, k_par = jax.random.split(key, 3)
    vis_feat = jax.random.normal(k_vis, (N, Ci, H, W), jnp.float32)
    lan_feat = jax.random.normal(k_lan, (N, Ct, T), jnp.float32)
    params = init_params(k_par, Ci, Ct)

    out = jax.block_until_ready(pixel_attention(vis_feat, lan_feat, params))
    ref = jax.block_until_ready(pixel_attention_ref(vis_feat, lan_feat, params))

    assert out.shape == (N, Ci, H, W)
    # bf16 MXU operands + approx softmax reciprocal -> loosened tolerance vs f32 ref.
    np.testing.assert_allclose(np.asarray(out), np.asarray(ref), rtol=3e-2, atol=3e-2)

    print("KERNEL_OK")
</pallas_src>

<mosaic_0001>
module attributes {stable_mosaic.version = 11 : i64} {
  func.func @kernel(%arg0: i32, %arg1: memref<1x8x256xbf16, #tpu.memory_space<vmem>>, %arg2: memref<1x16x8xbf16, #tpu.memory_space<vmem>>, %arg3: memref<16x8xbf16, #tpu.memory_space<vmem>>, %arg4: memref<8x8xbf16, #tpu.memory_space<vmem>>, %arg5: memref<16x16xbf16, #tpu.memory_space<vmem>>, %arg6: memref<8x8xf32, #tpu.memory_space<vmem>>, %arg7: memref<1x8x256xf32, #tpu.memory_space<vmem>>) attributes {dimension_semantics = [#tpu.dimension_semantics<parallel>], iteration_bounds = array<i64: 2>, scalar_prefetch = 0 : i64, scratch_operands = 0 : i64, tpu.core_type = #tpu.core_type<tc>, window_params = [{transform_indices = @transform_0, window_bounds = array<i64: 1, 8, 256>}, {transform_indices = @transform_1, window_bounds = array<i64: 1, 16, 8>}, {pipeline_mode = #tpu.pipeline_mode<synchronous>, transform_indices = @transform_2, window_bounds = array<i64: 16, 8>}, {pipeline_mode = #tpu.pipeline_mode<synchronous>, transform_indices = @transform_3, window_bounds = array<i64: 8, 8>}, {pipeline_mode = #tpu.pipeline_mode<synchronous>, transform_indices = @transform_4, window_bounds = array<i64: 16, 16>}, {pipeline_mode = #tpu.pipeline_mode<synchronous>, transform_indices = @transform_5, window_bounds = array<i64: 8, 8>}, {transform_indices = @transform_6, window_bounds = array<i64: 1, 8, 256>}]} {
    %c0 = arith.constant 0 : index
    %c0_0 = arith.constant 0 : index
    %0 = vector.load %arg3[%c0, %c0_0] : memref<16x8xbf16, #tpu.memory_space<vmem>>, vector<16x8xbf16>
    %c0_1 = arith.constant 0 : index
    %c0_2 = arith.constant 0 : index
    %1 = vector.load %arg4[%c0_1, %c0_2] : memref<8x8xbf16, #tpu.memory_space<vmem>>, vector<8x8xbf16>
    %c0_3 = arith.constant 0 : index
    %c0_4 = arith.constant 0 : index
    %2 = vector.load %arg5[%c0_3, %c0_4] : memref<16x16xbf16, #tpu.memory_space<vmem>>, vector<16x16xbf16>
    %c0_5 = arith.constant 0 : index
    %c0_6 = arith.constant 0 : index
    %3 = vector.load %arg6[%c0_5, %c0_6] : memref<8x8xf32, #tpu.memory_space<vmem>>, vector<8x8xf32>
    %4 = vector.extract_strided_slice %3 {offsets = [0, 0], sizes = [8, 1], strides = [1, 1]} : vector<8x8xf32> to vector<8x1xf32>
    %5 = vector.extract_strided_slice %3 {offsets = [0, 1], sizes = [8, 1], strides = [1, 1]} : vector<8x8xf32> to vector<8x1xf32>
    %6 = vector.extract_strided_slice %3 {offsets = [0, 2], sizes = [8, 1], strides = [1, 1]} : vector<8x8xf32> to vector<8x1xf32>
    %7 = vector.extract_strided_slice %3 {offsets = [0, 3], sizes = [8, 1], strides = [1, 1]} : vector<8x8xf32> to vector<8x1xf32>
    %8 = vector.extract_strided_slice %3 {offsets = [0, 4], sizes = [8, 1], strides = [1, 1]} : vector<8x8xf32> to vector<8x1xf32>
    %9 = vector.extract_strided_slice %3 {offsets = [0, 5], sizes = [8, 1], strides = [1, 1]} : vector<8x8xf32> to vector<8x1xf32>
    %10 = vector.extract_strided_slice %3 {offsets = [0, 6], sizes = [8, 1], strides = [1, 1]} : vector<8x8xf32> to vector<8x1xf32>
    %11 = vector.extract_strided_slice %3 {offsets = [0, 7], sizes = [8, 1], strides = [1, 1]} : vector<8x8xf32> to vector<8x1xf32>
    %c0_7 = arith.constant 0 : index
    %c0_8 = arith.constant 0 : index
    %c0_9 = arith.constant 0 : index
    %12 = vector.load %arg1[%c0_7, %c0_8, %c0_9] : memref<1x8x256xbf16, #tpu.memory_space<vmem>>, vector<1x8x256xbf16>
    %13 = vector.shape_cast %12 : vector<1x8x256xbf16> to vector<8x256xbf16>
    %c0_10 = arith.constant 0 : index
    %c0_11 = arith.constant 0 : index
    %c0_12 = arith.constant 0 : index
    %14 = vector.load %arg2[%c0_10, %c0_11, %c0_12] : memref<1x16x8xbf16, #tpu.memory_space<vmem>>, vector<1x16x8xbf16>
    %15 = vector.shape_cast %14 : vector<1x16x8xbf16> to vector<16x8xbf16>
    %cst = arith.constant dense<0.000000e+00> : vector<16x8xf32>
    %16 = tpu.matmul %2, %15, %cst {dimension_numbers = #tpu.dot_dimension_numbers<[1], [0], [0], [1], [0, 0, 1, 1], [], []>} : vector<16x16xbf16>, vector<16x8xbf16>, vector<16x8xf32> -> vector<16x8xf32>
    %17 = vector.extract_strided_slice %16 {offsets = [0, 0], sizes = [8, 8], strides = [1, 1]} : vector<16x8xf32> to vector<8x8xf32>
    %18 = vector.broadcast %5 : vector<8x1xf32> to vector<8x8xf32>
    %19 = arith.addf %17, %18 : vector<8x8xf32>
    %20 = vector.extract_strided_slice %16 {offsets = [8, 0], sizes = [8, 8], strides = [1, 1]} : vector<16x8xf32> to vector<8x8xf32>
    %21 = vector.broadcast %6 : vector<8x1xf32> to vector<8x8xf32>
    %22 = arith.addf %20, %21 : vector<8x8xf32>
    %cst_13 = arith.constant dense<0.000000e+00> : vector<16x256xf32>
    %23 = tpu.matmul %0, %13, %cst_13 {dimension_numbers = #tpu.dot_dimension_numbers<[1], [0], [0], [1], [0, 0, 1, 1], [], []>} : vector<16x8xbf16>, vector<8x256xbf16>, vector<16x256xf32> -> vector<16x256xf32>
    %24 = vector.extract_strided_slice %23 {offsets = [0, 0], sizes = [8, 256], strides = [1, 1]} : vector<16x256xf32> to vector<8x256xf32>
    %cst_14 = arith.constant dense<0.000000e+00> : vector<8xf32>
    %25 = vector.multi_reduction <add>, %24, %cst_14 [1] : vector<8x256xf32> to vector<8xf32>
    %26 = vector.shape_cast %25 : vector<8xf32> to vector<8x1xf32>
    %27 = arith.mulf %24, %24 : vector<8x256xf32>
    %cst_15 = arith.constant dense<0.000000e+00> : vector<8xf32>
    %28 = vector.multi_reduction <add>, %27, %cst_15 [1] : vector<8x256xf32> to vector<8xf32>
    %29 = vector.shape_cast %28 : vector<8xf32> to vector<8x1xf32>
    %cst_16 = arith.constant 3.906250e-03 : f32
    %30 = vector.broadcast %cst_16 : f32 to vector<8x1xf32>
    %31 = arith.mulf %26, %30 : vector<8x1xf32>
    %cst_17 = arith.constant 3.906250e-03 : f32
    %32 = vector.broadcast %cst_17 : f32 to vector<8x1xf32>
    %33 = arith.mulf %29, %32 : vector<8x1xf32>
    %34 = arith.mulf %31, %31 : vector<8x1xf32>
    %35 = arith.subf %33, %34 : vector<8x1xf32>
    %cst_18 = arith.constant 0.000000e+00 : f32
    %36 = vector.broadcast %cst_18 : f32 to vector<8x1xf32>
    %37 = arith.maximumf %35, %36 : vector<8x1xf32>
    %cst_19 = arith.constant 9.99999974E-6 : f32
    %38 = vector.broadcast %cst_19 : f32 to vector<8x1xf32>
    %39 = arith.addf %37, %38 : vector<8x1xf32>
    %40 = math.rsqrt %39 : vector<8x1xf32>
    %41 = vector.broadcast %31 : vector<8x1xf32> to vector<8x256xf32>
    %42 = arith.subf %24, %41 : vector<8x256xf32>
    %43 = arith.mulf %40, %8 : vector<8x1xf32>
    %44 = vector.broadcast %43 : vector<8x1xf32> to vector<8x256xf32>
    %45 = arith.mulf %42, %44 : vector<8x256xf32>
    %46 = vector.broadcast %9 : vector<8x1xf32> to vector<8x256xf32>
    %47 = arith.addf %45, %46 : vector<8x256xf32>
    %48 = vector.extract_strided_slice %23 {offsets = [8, 0], sizes = [8, 256], strides = [1, 1]} : vector<16x256xf32> to vector<8x256xf32>
    %49 = vector.broadcast %4 : vector<8x1xf32> to vector<8x256xf32>
    %50 = arith.addf %48, %49 : vector<8x256xf32>
    %cst_20 = arith.constant 0.000000e+00 : f32
    %51 = vector.broadcast %cst_20 : f32 to vector<8x256xf32>
    %52 = arith.maximumf %50, %51 : vector<8x256xf32>
    %53 = arith.truncf %19 : vector<8x8xf32> to vector<8x8xbf16>
    %54 = arith.truncf %47 : vector<8x256xf32> to vector<8x256xbf16>
    %cst_21 = arith.constant dense<0.000000e+00> : vector<8x256xf32>
    %55 = tpu.matmul %53, %54, %cst_21 {dimension_numbers = #tpu.dot_dimension_numbers<[0], [0], [1], [1], [0, 1, 1, 1], [], []>} : vector<8x8xbf16>, vector<8x256xbf16>, vector<8x256xf32> -> vector<8x256xf32>
    %cst_22 = arith.constant 0.353553385 : f32
    %56 = vector.broadcast %cst_22 : f32 to vector<8x256xf32>
    %57 = arith.mulf %55, %56 : vector<8x256xf32>
    %cst_23 = arith.constant dense<0xFF800000> : vector<256xf32>
    %58 = vector.multi_reduction <maximumf>, %57, %cst_23 [0] : vector<8x256xf32> to vector<256xf32>
    %59 = vector.shape_cast %58 : vector<256xf32> to vector<1x256xf32>
    %60 = vector.broadcast %59 : vector<1x256xf32> to vector<8x256xf32>
    %61 = arith.subf %57, %60 : vector<8x256xf32>
    %62 = math.exp %61 : vector<8x256xf32>
    %cst_24 = arith.constant dense<0.000000e+00> : vector<256xf32>
    %63 = vector.multi_reduction <add>, %62, %cst_24 [0] : vector<8x256xf32> to vector<256xf32>
    %64 = vector.shape_cast %63 : vector<256xf32> to vector<1x256xf32>
    %65 = tpu.reciprocal %64 {approx = true} : vector<1x256xf32> -> vector<1x256xf32>
    %66 = vector.broadcast %65 : vector<1x256xf32> to vector<8x256xf32>
    %67 = arith.mulf %62, %66 : vector<8x256xf32>
    %68 = arith.truncf %22 : vector<8x8xf32> to vector<8x8xbf16>
    %69 = arith.truncf %67 : vector<8x256xf32> to vector<8x256xbf16>
    %cst_25 = arith.constant dense<0.000000e+00> : vector<8x256xf32>
    %70 = tpu.matmul %68, %69, %cst_25 {dimension_numbers = #tpu.dot_dimension_numbers<[1], [0], [0], [1], [0, 0, 1, 1], [], []>} : vector<8x8xbf16>, vector<8x256xbf16>, vector<8x256xf32> -> vector<8x256xf32>
    %cst_26 = arith.constant dense<0.000000e+00> : vector<8xf32>
    %71 = vector.multi_reduction <add>, %70, %cst_26 [1] : vector<8x256xf32> to vector<8xf32>
    %72 = vector.shape_cast %71 : vector<8xf32> to vector<8x1xf32>
    %73 = arith.mulf %70, %70 : vector<8x256xf32>
    %cst_27 = arith.constant dense<0.000000e+00> : vector<8xf32>
    %74 = vector.multi_reduction <add>, %73, %cst_27 [1] : vector<8x256xf32> to vector<8xf32>
    %75 = vector.shape_cast %74 : vector<8xf32> to vector<8x1xf32>
    %cst_28 = arith.constant 3.906250e-03 : f32
    %76 = vector.broadcast %cst_28 : f32 to vector<8x1xf32>
    %77 = arith.mulf %72, %76 : vector<8x1xf32>
    %cst_29 = arith.constant 3.906250e-03 : f32
    %78 = vector.broadcast %cst_29 : f32 to vector<8x1xf32>
    %79 = arith.mulf %75, %78 : vector<8x1xf32>
    %80 = arith.mulf %77, %77 : vector<8x1xf32>
    %81 = arith.subf %79, %80 : vector<8x1xf32>
    %cst_30 = arith.constant 0.000000e+00 : f32
    %82 = vector.broadcast %cst_30 : f32 to vector<8x1xf32>
    %83 = arith.maximumf %81, %82 : vector<8x1xf32>
    %cst_31 = arith.constant 9.99999974E-6 : f32
    %84 = vector.broadcast %cst_31 : f32 to vector<8x1xf32>
    %85 = arith.addf %83, %84 : vector<8x1xf32>
    %86 = math.rsqrt %85 : vector<8x1xf32>
    %87 = vector.broadcast %77 : vector<8x1xf32> to vector<8x256xf32>
    %88 = arith.subf %70, %87 : vector<8x256xf32>
    %89 = arith.mulf %86, %10 : vector<8x1xf32>
    %90 = vector.broadcast %89 : vector<8x1xf32> to vector<8x256xf32>
    %91 = arith.mulf %88, %90 : vector<8x256xf32>
    %92 = vector.broadcast %11 : vector<8x1xf32> to vector<8x256xf32>
    %93 = arith.addf %91, %92 : vector<8x256xf32>
    %94 = arith.mulf %52, %93 : vector<8x256xf32>
    %95 = arith.truncf %94 : vector<8x256xf32> to vector<8x256xbf16>
    %cst_32 = arith.constant dense<0.000000e+00> : vector<8x256xf32>
    %96 = tpu.matmul %1, %95, %cst_32 {dimension_numbers = #tpu.dot_dimension_numbers<[1], [0], [0], [1], [0, 0, 1, 1], [], []>} : vector<8x8xbf16>, vector<8x256xbf16>, vector<8x256xf32> -> vector<8x256xf32>
    %97 = vector.broadcast %7 : vector<8x1xf32> to vector<8x256xf32>
    %98 = arith.addf %96, %97 : vector<8x256xf32>
    %cst_33 = arith.constant 0.000000e+00 : f32
    %99 = vector.broadcast %cst_33 : f32 to vector<8x256xf32>
    %100 = arith.maximumf %98, %99 : vector<8x256xf32>
    %c0_34 = arith.constant 0 : index
    %c0_35 = arith.constant 0 : index
    %c0_36 = arith.constant 0 : index
    %101 = vector.load %arg7[%c0_34, %c0_35, %c0_36] : memref<1x8x256xf32, #tpu.memory_space<vmem>>, vector<1x8x256xf32>
    %102 = vector.shape_cast %101 : vector<1x8x256xf32> to vector<8x256xf32>
    %103 = vector.shape_cast %100 : vector<8x256xf32> to vector<1x8x256xf32>
    tpu.vector_store %arg7[%c0_34, %c0_35, %c0_36], %103 {strides = array<i32>} : memref<1x8x256xf32, #tpu.memory_space<vmem>>, vector<1x8x256xf32>,
    return
  }
  func.func @transform_0(%arg0: i32) -> (i32, i32, i32) {
    %c0_i32 = arith.constant 0 : i32
    %c0_i32_0 = arith.constant 0 : i32
    %c0_i32_1 = arith.constant 0 : i32
    return %arg0, %c0_i32, %c0_i32_0 : i32, i32, i32
  }
  func.func @transform_1(%arg0: i32) -> (i32, i32, i32) {
    %c0_i32 = arith.constant 0 : i32
    %c0_i32_0 = arith.constant 0 : i32
    %c0_i32_1 = arith.constant 0 : i32
    return %arg0, %c0_i32, %c0_i32_0 : i32, i32, i32
  }
  func.func @transform_2(%arg0: i32) -> (i32, i32) {
    %c0_i32 = arith.constant 0 : i32
    %c0_i32_0 = arith.constant 0 : i32
    %c0_i32_1 = arith.constant 0 : i32
    return %c0_i32, %c0_i32_0 : i32, i32
  }
  func.func @transform_3(%arg0: i32) -> (i32, i32) {
    %c0_i32 = arith.constant 0 : i32
    %c0_i32_0 = arith.constant 0 : i32
    %c0_i32_1 = arith.constant 0 : i32
    return %c0_i32, %c0_i32_0 : i32, i32
  }
  func.func @transform_4(%arg0: i32) -> (i32, i32) {
    %c0_i32 = arith.constant 0 : i32
    %c0_i32_0 = arith.constant 0 : i32
    %c0_i32_1 = arith.constant 0 : i32
    return %c0_i32, %c0_i32_0 : i32, i32
  }
  func.func @transform_5(%arg0: i32) -> (i32, i32) {
    %c0_i32 = arith.constant 0 : i32
    %c0_i32_0 = arith.constant 0 : i32
    %c0_i32_1 = arith.constant 0 : i32
    return %c0_i32, %c0_i32_0 : i32, i32
  }
  func.func @transform_6(%arg0: i32) -> (i32, i32, i32) {
    %c0_i32 = arith.constant 0 : i32
    %c0_i32_0 = arith.constant 0 : i32
    %c0_i32_1 = arith.constant 0 : i32
    return %arg0, %c0_i32, %c0_i32_0 : i32, i32, i32
  }
}

</mosaic_0001>

<llo_original>
// kernel: tpu_custom_call.1
$region0: #{tpu_custom_call.1}
  #allocation0 [shape = 'u32[]', space=smem, size = 0x4, offset = 0x4, fixed_abs, tag = 'smem constant byte address 0x4 - core index']
  #allocation1 [shape = 'u32[144,128]{1,0:T(1,128)}', space=vmem, size = 0x12000, scoped, tag = 'internal scratch']
  %s0 = inlined_call_operand.vmem [shape: bf16[2,8,256], index: 0, kind: input, shape index: {}]
  %s1 = inlined_call_operand.vmem [shape: bf16[2,16,8], index: 1, kind: input, shape index: {}]
  %s2 = inlined_call_operand.vmem [shape: bf16[16,8], index: 2, kind: input, shape index: {}]
  %s3 = inlined_call_operand.vmem [shape: bf16[8,8], index: 3, kind: input, shape index: {}]
  %s4 = inlined_call_operand.vmem [shape: bf16[16,16], index: 4, kind: input, shape index: {}]
  %s5 = inlined_call_operand.vmem [shape: f32[8,8], index: 5, kind: input, shape index: {}]
  %s6 = inlined_call_operand.hbm [shape: f32[2,8,256], index: 6, kind: output, shape index: {}]
  %s7 = sld [smem:[#allocation0]]
  $region57: #{tpu_custom_call.1} parent=0
    _
  %s9 = ssub.s32 1, %s7
  %s10 = scalar_select 0, %s9, %s7
  $region1: #{tpu_custom_call.1} parent=0
    #allocation2 [shape = 'u8[16384]{0}', space=vmem, size = 0x4000, scoped, tag = 'output window, operand 0']
    #allocation3 [shape = 's32[2]{0}', space=sflag, size = 0x8, scoped, tag = 'scoped memory for tpu_custom_call.1']
    %11 = vsyncpa [#allocation3], 0
    %s12 = scalar_lea.sflag [#allocation3], 1
    %13 = vsyncpa %s12, 0
    loop: start=0, step=1, limit=4
    $region2: #{tpu_custom_call.1} parent=1 // loop_pre_header
      _
    $region3: #{tpu_custom_call.1} parent=1 // loop_header
      %s15 = sphi 0, %s19
      %p16 = scmp.ge.s32.totalorder %s15, 4
      %s25 = sphi 0, %s27
      %s28 = sphi 0, %s25
      %s29 = sphi 0, %s28
      %s45 = sphi 0, %s29
      %s51 = sphi 0, %s53
      %s54 = sphi 0, %s51
      %s55 = sphi 0, %s54
      %s71 = sphi 0, %s55
      %s75 = sphi 0, %s75
      %s77 = sphi 0, %s75
      %s78 = sphi 0, %s77
      %s92 = sphi 0, %s78
      %s96 = sphi 0, %s96
      %s98 = sphi 0, %s96
      %s99 = sphi 0, %s98
      %s113 = sphi 0, %s99
      %s117 = sphi 0, %s117
      %s119 = sphi 0, %s117
      %s120 = sphi 0, %s119
      %s134 = sphi 0, %s120
      %s138 = sphi 0, %s138
      %s140 = sphi 0, %s138
      %s141 = sphi 0, %s140
      %s155 = sphi 0, %s141
      %s161 = sphi 0, %s163
      %s164 = sphi 0, %s161
      %s165 = sphi 0, %s164
      %s181 = sphi 0, %s165
    $region4: #{tpu_custom_call.1} parent=1 // loop_header_branch
      %18 = sbr.rel (%p16) target = $region8
    $region5: #{tpu_custom_call.1} parent=1 // loop_body
      %s20 = ssub.s32 %s15, 1
      %s21 = ssub.s32 %s15, 2
      %s22 = sadd.s32 %s15, 1
      %s23 = ssub.s32 %s15, %s22
      %p24 = scmp.eq.s32.totalorder %s23, 0
      %s26 = sadd.s32 %s25, 1
      %s27 = scalar_select %p24, %s25, %s26
      %p30 = pneg %p24
      %p31 = scmp.eq.s32.totalorder %s15, 1
      %p32 = por %p30, %p31
      %p33 = scmp.ne.s32.totalorder %s25, %s28
      %p34 = scmp.eq.s32.totalorder %s15, 0
      %p35 = por %p33, %p34
      %p36 = scmp.ne.s32.totalorder %s25, %s28
      %p37 = scmp.eq.s32.totalorder %s20, 1
      %p38 = por %p36, %p37
      %p39 = scmp.ne.s32.totalorder %s28, %s29
      %p40 = scmp.eq.s32.totalorder %s20, 0
      %p41 = por %p39, %p40
      %p42 = scmp.ne.s32.totalorder %s28, %s29
      %p43 = scmp.eq.s32.totalorder %s21, 1
      %p44 = por %p42, %p43
      %p46 = scmp.ne.s32.totalorder %s29, %s45
      %p47 = scmp.eq.s32.totalorder %s21, 0
      %p48 = por %p46, %p47
      %s49 = ssub.s32 %s15, %s22
      %p50 = scmp.eq.s32.totalorder %s49, 0
      %s52 = sadd.s32 %s51, 1
      %s53 = scalar_select %p50, %s51, %s52
      %p56 = pneg %p50
      %p57 = scmp.eq.s32.totalorder %s15, 1
      %p58 = por %p56, %p57
      %p59 = scmp.ne.s32.totalorder %s51, %s54
      %p60 = scmp.eq.s32.totalorder %s15, 0
      %p61 = por %p59, %p60
      %p62 = scmp.ne.s32.totalorder %s51, %s54
      %p63 = scmp.eq.s32.totalorder %s20, 1
      %p64 = por %p62, %p63
      %p65 = scmp.ne.s32.totalorder %s54, %s55
      %p66 = scmp.eq.s32.totalorder %s20, 0
      %p67 = por %p65, %p66
      %p68 = scmp.ne.s32.totalorder %s54, %s55
      %p69 = scmp.eq.s32.totalorder %s21, 1
      %p70 = por %p68, %p69
      %p72 = scmp.ne.s32.totalorder %s55, %s71
      %p73 = scmp.eq.s32.totalorder %s21, 0
      %p74 = por %p72, %p73
      %s76 = sadd.s32 %s75, 1
      %p79 = scmp.eq.s32.totalorder %s15, 1
      %p80 = scmp.ne.s32.totalorder %s75, %s77
      %p81 = scmp.eq.s32.totalorder %s15, 0
      %p82 = por %p80, %p81
      %p83 = scmp.ne.s32.totalorder %s75, %s77
      %p84 = scmp.eq.s32.totalorder %s20, 1
      %p85 = por %p83, %p84
      %p86 = scmp.ne.s32.totalorder %s77, %s78
      %p87 = scmp.eq.s32.totalorder %s20, 0
      %p88 = por %p86, %p87
      %p89 = scmp.ne.s32.totalorder %s77, %s78
      %p90 = scmp.eq.s32.totalorder %s21, 1
      %p91 = por %p89, %p90
      %p93 = scmp.ne.s32.totalorder %s78, %s92
      %p94 = scmp.eq.s32.totalorder %s21, 0
      %p95 = por %p93, %p94
      %s97 = sadd.s32 %s96, 1
      %p100 = scmp.eq.s32.totalorder %s15, 1
      %p101 = scmp.ne.s32.totalorder %s96, %s98
      %p102 = scmp.eq.s32.totalorder %s15, 0
      %p103 = por %p101, %p102
      %p104 = scmp.ne.s32.totalorder %s96, %s98
      %p105 = scmp.eq.s32.totalorder %s20, 1
      %p106 = por %p104, %p105
      %p107 = scmp.ne.s32.totalorder %s98, %s99
      %p108 = scmp.eq.s32.totalorder %s20, 0
      %p109 = por %p107, %p108
      %p110 = scmp.ne.s32.totalorder %s98, %s99
      %p111 = scmp.eq.s32.totalorder %s21, 1
      %p112 = por %p110, %p111
      %p114 = scmp.ne.s32.totalorder %s99, %s113
      %p115 = scmp.eq.s32.totalorder %s21, 0
      %p116 = por %p114, %p115
      %s118 = sadd.s32 %s117, 1
      %p121 = scmp.eq.s32.totalorder %s15, 1
      %p122 = scmp.ne.s32.totalorder %s117, %s119
      %p123 = scmp.eq.s32.totalorder %s15, 0
      %p124 = por %p122, %p123
      %p125 = scmp.ne.s32.totalorder %s117, %s119
      %p126 = scmp.eq.s32.totalorder %s20, 1
      %p127 = por %p125, %p126
      %p128 = scmp.ne.s32.totalorder %s119, %s120
      %p129 = scmp.eq.s32.totalorder %s20, 0
      %p130 = por %p128, %p129
      %p131 = scmp.ne.s32.totalorder %s119, %s120
      %p132 = scmp.eq.s32.totalorder %s21, 1
      %p133 = por %p131, %p132
      %p135 = scmp.ne.s32.totalorder %s120, %s134
      %p136 = scmp.eq.s32.totalorder %s21, 0
      %p137 = por %p135, %p136
      %s139 = sadd.s32 %s138, 1
      %p142 = scmp.eq.s32.totalorder %s15, 1
      %p143 = scmp.ne.s32.totalorder %s138, %s140
      %p144 = scmp.eq.s32.totalorder %s15, 0
      %p145 = por %p143, %p144
      %p146 = scmp.ne.s32.totalorder %s138, %s140
      %p147 = scmp.eq.s32.totalorder %s20, 1
      %p148 = por %p146, %p147
      %p149 = scmp.ne.s32.totalorder %s140, %s141
      %p150 = scmp.eq.s32.totalorder %s20, 0
      %p151 = por %p149, %p150
      %p152 = scmp.ne.s32.totalorder %s140, %s141
      %p153 = scmp.eq.s32.totalorder %s21, 1
      %p154 = por %p152, %p153
      %p156 = scmp.ne.s32.totalorder %s141, %s155
      %p157 = scmp.eq.s32.totalorder %s21, 0
      %p158 = por %p156, %p157
      %s159 = ssub.s32 %s15, %s22
      %p160 = scmp.eq.s32.totalorder %s159, 0
      %s162 = sadd.s32 %s161, 1
      %s163 = scalar_select %p160, %s161, %s162
      %p166 = pneg %p160
      %p167 = scmp.eq.s32.totalorder %s15, 1
      %p168 = por %p166, %p167
      %p169 = scmp.ne.s32.totalorder %s161, %s164
      %p170 = scmp.eq.s32.totalorder %s15, 0
      %p171 = por %p169, %p170
      %p172 = scmp.ne.s32.totalorder %s161, %s164
      %p173 = scmp.eq.s32.totalorder %s20, 1
      %p174 = por %p172, %p173
      %p175 = scmp.ne.s32.totalorder %s164, %s165
      %p176 = scmp.eq.s32.totalorder %s20, 0
      %p177 = por %p175, %p176
      %p178 = scmp.ne.s32.totalorder %s164, %s165
      %p179 = scmp.eq.s32.totalorder %s21, 1
      %p180 = por %p178, %p179
      %p182 = scmp.ne.s32.totalorder %s165, %s181
      %p183 = scmp.eq.s32.totalorder %s21, 0
      %p184 = por %p182, %p183
      %p185 = scmp.le.s32.totalorder 1, %s15
      %p186 = scmp.lt.s32.totalorder %s15, 3
      %p187 = pnand %p185, %p186
      %p188 = pneg %p187
      // Predicated region
      $region9: #{tpu_custom_call.1} parent=5 // pred_check
        _
      $region10: #{tpu_custom_call.1} parent=5 // pred_check_branch
        %190 = sbr.rel (%p187) target = $region12
      $region11: #{tpu_custom_call.1} parent=5 // pred_region
        %s191 = ssub.s32 %s15, 1
        // Predicated region
        $region13: #{tpu_custom_call.1} parent=11 // pred_check
          %p192 = pneg %p88
        $region14: #{tpu_custom_call.1} parent=11 // pred_check_branch
          %194 = sbr.rel (%p192) target = $region16
        $region15: #{tpu_custom_call.1} parent=11 // pred_region
          _
        $region16: #{tpu_custom_call.1} parent=11 // pred_fallthru
          _
        // Predicated region
        $region17: #{tpu_custom_call.1} parent=11 // pred_check
          %p195 = pneg %p109
        $region18: #{tpu_custom_call.1} parent=11 // pred_check_branch
          %197 = sbr.rel (%p195) target = $region20
        $region19: #{tpu_custom_call.1} parent=11 // pred_region
          _
        $region20: #{tpu_custom_call.1} parent=11 // pred_fallthru
          _
        // Predicated region
        $region21: #{tpu_custom_call.1} parent=11 // pred_check
          %p198 = pneg %p130
        $region22: #{tpu_custom_call.1} parent=11 // pred_check_branch
          %200 = sbr.rel (%p198) target = $region24
        $region23: #{tpu_custom_call.1} parent=11 // pred_region
          _
        $region24: #{tpu_custom_call.1} parent=11 // pred_fallthru
          _
        // Predicated region
        $region25: #{tpu_custom_call.1} parent=11 // pred_check
          %p201 = pneg %p151
        $region26: #{tpu_custom_call.1} parent=11 // pred_check_branch
          %203 = sbr.rel (%p201) target = $region28
        $region27: #{tpu_custom_call.1} parent=11 // pred_region
          _
        $region28: #{tpu_custom_call.1} parent=11 // pred_fallthru
          _
      $region12: #{tpu_custom_call.1} parent=5 // pred_fallthru
        _
      %p204 = scmp.lt.s32.totalorder %s15, 2
      // Predicated region
      $region29: #{tpu_custom_call.1} parent=5 // pred_check
        %p205 = pneg %p204
      $region30: #{tpu_custom_call.1} parent=5 // pred_check_branch
        %207 = sbr.rel (%p205) target = $region32
      $region31: #{tpu_custom_call.1} parent=5 // pred_region
        // Predicated region
        $region33: #{tpu_custom_call.1} parent=31 // pred_check
          %p208 = pneg %p35
        $region34: #{tpu_custom_call.1} parent=31 // pred_check_branch
          %210 = sbr.rel (%p208) target = $region36
        $region35: #{tpu_custom_call.1} parent=31 // pred_region
          %p211 = scmp.lt.s32.totalorder %s15, 1
          %s212 = scalar_select %p211, %s15, 1
          %s213 = smul.addr %s212, 2
          %s214 = smul.addr %s213, 4
          %s215 = scalar_lea.vmem %s0, %s214
        $region36: #{tpu_custom_call.1} parent=31 // pred_fallthru
          _
        // Predicated region
        $region37: #{tpu_custom_call.1} parent=31 // pred_check
          %p216 = pneg %p61
        $region38: #{tpu_custom_call.1} parent=31 // pred_check_branch
          %218 = sbr.rel (%p216) target = $region40
        $region39: #{tpu_custom_call.1} parent=31 // pred_region
          %p219 = scmp.lt.s32.totalorder %s15, 1
          %s220 = scalar_select %p219, %s15, 1
          %s221 = smul.addr %s220, 2
          %s222 = smul.addr %s221, 4
          %s223 = scalar_lea.vmem %s1, %s222
        $region40: #{tpu_custom_call.1} parent=31 // pred_fallthru
          _
      $region32: #{tpu_custom_call.1} parent=5 // pred_fallthru
        _
      %p224 = scmp.le.s32.totalorder 1, %s15
      %p225 = scmp.lt.s32.totalorder %s15, 3
      %p226 = pnand %p224, %p225
      %p227 = pneg %p226
      // Predicated region
      $region41: #{tpu_custom_call.1} parent=5 // pred_check
        _
      $region42: #{tpu_custom_call.1} parent=5 // pred_check_branch
        %229 = sbr.rel (%p226) target = $region44
      $region43: #{tpu_custom_call.1} parent=5 // pred_region
        %s230 = ssub.s32 %s15, 1
        %p231 = scmp.lt.s32.totalorder %s20, 1
        %s232 = scalar_select %p231, %s20, 1
        %s233 = smul.addr %s232, 2
        %s234 = smul.addr %s233, 4
        %s235 = scalar_lea.vmem %s0, %s234
        %p236 = pneg %p41
        %p237 = pneg %p38
        %p238 = scmp.lt.s32.totalorder %s20, 1
        %s239 = scalar_select %p238, %s20, 1
        %s240 = smul.addr %s239, 2
        %s241 = smul.addr %s240, 4
        %s242 = scalar_lea.vmem %s1, %s241
        %p243 = pneg %p67
        %p244 = pneg %p64
        %p245 = pneg %p88
        %p246 = pneg %p85
        %p247 = pneg %p109
        %p248 = pneg %p106
        %p249 = pneg %p130
        %p250 = pneg %p127
        %p251 = pneg %p151
        %p252 = pneg %p148
        %p253 = pneg %p177
        %p254 = pneg %p174
        %s255 = sand.u32 %s164, 1
        %s256 = scalar_lea.sflag [#allocation3], %s255
        %s257 = sand.u32 %s164, 1
        %s258 = smul.addr %s257, 16
        %s259 = scalar_lea.vmem [#allocation2], %s258
        %p260 = scmp.lt.s32.totalorder %s20, 1
        %s261 = scalar_select %p260, %s20, 1
        %s262 = smul.addr %s261, 2
        %s263 = smul.addr %s262, 4
        %s264 = scalar_lea.vmem %s0, %s263
        %p265 = scmp.lt.s32.totalorder %s20, 1
        %s266 = scalar_select %p265, %s20, 1
        %s267 = smul.addr %s266, 2
        %s268 = smul.addr %s267, 4
        %s269 = scalar_lea.vmem %s1, %s268
        %v271 = vld [vmem:[%s2] sm:$0xf]
        %v272 = vld [vmem:[%s2 + $0x4] sm:$0xf]
        %v273 = vld [vmem:[%s3] sm:$0xf]
        %v274 = vld [vmem:[%s4] sm:$0xf]
        %v275 = vld [vmem:[%s4 + $0x4] sm:$0xf]
        %v276 = vld [vmem:[%s5] sm:$0xff]
        %v277 = vld [vmem:[%s264] sm:$0xff]
        %v278 = vld [vmem:[%s269] sm:$0xf]
        %v279 = vld [vmem:[%s269 + $0x4] sm:$0xf]
        %v282 = vunpack.c.l.b16 %v274
        %v283 = vunpack.c.l.b16 %v275
        %v284 = vpack.c.b16 %v283, %v282
        %v287 = vunpack.c.l.b16 %v278
        %v288 = vunpack.c.l.b16 %v279
        %v289 = vpack.c.b16 %v288, %v287
        %vm291 = vcmask 130048
        %v293 = vsel %vm291, %v284, 0
        %295 = vmatprep.subr.bf16.mxu0 0
        %296 = vmatpush1.bf16.msra.mxu0 %v289
        %297 = vmatprep.subr.bf16.mxu0 0
        %298 = vmatpush1.bf16.msra.mxu0 0
        %299 = vmatprep.subr.bf16.mxu0 0
        %300 = vmatpush1.bf16.msra.mxu0 0
        %301 = vmatprep.subr.bf16.mxu0 0
        %302 = vmatpush1.bf16.msra.mxu0 0
        %303 = vmatprep.subr.bf16.mxu0 0
        %304 = vmatpush1.bf16.msra.mxu0 0
        %305 = vmatprep.subr.bf16.mxu0 0
        %306 = vmatpush1.bf16.msra.mxu0 0
        %307 = vmatprep.subr.bf16.mxu0 0
        %308 = vmatpush1.bf16.msra.mxu0 0
        %309 = vmatprep.subr.bf16.mxu0 0
        %310 = vmatpush1.bf16.msra.mxu0 0
        %311 = vmatprep.subr.bf16.mxu0 0
        %312 = vmatpush1.bf16.msra.mxu0 0
        %313 = vmatprep.subr.bf16.mxu0 0
        %314 = vmatpush1.bf16.msra.mxu0 0
        %315 = vmatprep.subr.bf16.mxu0 0
        %316 = vmatpush1.bf16.msra.mxu0 0
        %317 = vmatprep.subr.bf16.mxu0 0
        %318 = vmatpush1.bf16.msra.mxu0 0
        %319 = vmatprep.subr.bf16.mxu0 0
        %320 = vmatpush1.bf16.msra.mxu0 0
        %321 = vmatprep.subr.bf16.mxu0 0
        %322 = vmatpush1.bf16.msra.mxu0 0
        %323 = vmatprep.subr.bf16.mxu0 0
        %324 = vmatpush1.bf16.msra.mxu0 0
        %325 = vmatprep.subr.bf16.mxu0 0
        %326 = vmatpush1.bf16.msra.mxu0 0
        %327 = vmatprep.mubr.bf16.mxu0 0
        %328 = vmatmul.mubr.bf16.gmra.mrb[0].mxu0 %v293
        %v329 = vpop.f32.mrb[0].mxu0
        %v330 = vadd.f32 0.0, %v329
        %v331 = vpop.f32.mrb[0].mxu0
        %v332 = vpop.f32.mrb[0].mxu0
        %v333 = vadd.f32 0.0, %v332
        %v334 = vpop.f32.mrb[0].mxu0
        %335 = vdwg.mxu0
        %337 = vset.pattern.permute.xlu0 1
        %338 = vperm.xlu0 %337, %v276
        %v339 = vpop.permute.xlu0 %338
        %v341 = vadd.f32 %v330, %v339
        %342 = vset.pattern.permute.xlu0 2
        %343 = vperm.xlu0 %342, %v276
        %v344 = vpop.permute.xlu0 %343
        %v346 = vadd.f32 %v333, %v344
        %v349 = vunpack.c.l.b16 %v271
        %v350 = vunpack.c.l.b16 %v272
        %v351 = vpack.c.b16 %v350, %v349
        %v353 = vunpack.c.l.b16 %v277
        %v354 = vunpack.c.h.b16 %v277
        %v355 = vpack.c.b16 %v353, %v353
        %v356 = vpack.c.b16 %v354, %v354
        %vm357 = vcmask 64512
        %v359 = vsel %vm357, %v351, 0
        %vm361 = vcmask 1043456
        %v363 = vsel %vm361, %v355, 0
        %v366 = vsel %vm361, %v356, 0
        %368 = vmatprep.subr.bf16.mxu0 %v366
        %369 = vmatpush1.bf16.msra.mxu0 %v363
        %370 = vmatprep.subr.bf16.mxu0 0
        %371 = vmatpush1.bf16.msra.mxu0 0
        %372 = vmatprep.subr.bf16.mxu0 0
        %373 = vmatpush1.bf16.msra.mxu0 0
        %374 = vmatprep.subr.bf16.mxu0 0
        %375 = vmatpush1.bf16.msra.mxu0 0
        %376 = vmatprep.subr.bf16.mxu0 0
        %377 = vmatpush1.bf16.msra.mxu0 0
        %378 = vmatprep.subr.bf16.mxu0 0
        %379 = vmatpush1.bf16.msra.mxu0 0
        %380 = vmatprep.subr.bf16.mxu0 0
        %381 = vmatpush1.bf16.msra.mxu0 0
        %382 = vmatprep.subr.bf16.mxu0 0
        %383 = vmatpush1.bf16.msra.mxu0 0
        %384 = vmatprep.subr.bf16.mxu0 0
        %385 = vmatpush1.bf16.msra.mxu0 0
        %386 = vmatprep.subr.bf16.mxu0 0
        %387 = vmatpush1.bf16.msra.mxu0 0
        %388 = vmatprep.subr.bf16.mxu0 0
        %389 = vmatpush1.bf16.msra.mxu0 0
        %390 = vmatprep.subr.bf16.mxu0 0
        %391 = vmatpush1.bf16.msra.mxu0 0
        %392 = vmatprep.subr.bf16.mxu0 0
        %393 = vmatpush1.bf16.msra.mxu0 0
        %394 = vmatprep.subr.bf16.mxu0 0
        %395 = vmatpush1.bf16.msra.mxu0 0
        %396 = vmatprep.subr.bf16.mxu0 0
        %397 = vmatpush1.bf16.msra.mxu0 0
        %398 = vmatprep.subr.bf16.mxu0 0
        %399 = vmatpush1.bf16.msra.mxu0 0
        %400 = vmatprep.mubr.bf16.mxu0 0
        %401 = vmatmul.mubr.bf16.gmra.mrb[0].mxu0 %v359
        %v402 = vpop.f32.mrb[0].mxu0
        %v403 = vadd.f32 0.0, %v402
        %v404 = vpop.f32.mrb[0].mxu0
        %v405 = vadd.f32 0.0, %v404
        %v406 = vpop.f32.mrb[0].mxu0
        %v407 = vadd.f32 0.0, %v406
        %v408 = vpop.f32.mrb[0].mxu0
        %v409 = vadd.f32 0.0, %v408
        %410 = vdwg.mxu0
        %v411 = vadd.f32 %v403, %v405
        %412 = vadd.xlane.f32.xlu0 %v411
        %v413 = vpop.xlane.xlu0 %412
        %v414 = vmul.f32 %v403, %v403
        %v415 = vmul.f32 %v405, %v405
        %v416 = vadd.f32 %v414, %v415
        %417 = vadd.xlane.f32.xlu0 %v416
        %v418 = vpop.xlane.xlu0 %417
        %v419 = vmul.f32 %v413, 0.00390625
        %v420 = vmul.f32 %v418, 0.00390625
        %v421 = vmul.f32 %v419, %v419
        %v422 = vsub.f32 %v420, %v421
        %v423 = vmax.f32 %v422, 0.0
        %v424 = vadd.f32 %v423, 1e-05
        %v425 = vrsqrt.pop %v424
        %v426 = vsub.f32 %v403, %v419
        %v427 = vsub.f32 %v405, %v419
        %v428 = vmul.f32 %v425, %v276
        %430 = vset.pattern.permute.xlu0 4
        %431 = vperm.xlu0 %430, %v428
        %v432 = vpop.permute.xlu0 %431
        %v434 = vmul.f32 %v426, %v432
        %v435 = vmul.f32 %v427, %v432
        %436 = vset.pattern.permute.xlu0 5
        %437 = vperm.xlu0 %436, %v276
        %v438 = vpop.permute.xlu0 %437
        %v440 = vadd.f32 %v434, %v438
        %v441 = vadd.f32 %v435, %v438
        %442 = vset.pattern.permute.xlu0 0
        %443 = vperm.xlu0 %442, %v276
        %v444 = vpop.permute.xlu0 %443
        %v446 = vadd.f32 %v407, %v444
        %v447 = vadd.f32 %v409, %v444
        %v448 = vmax.f32 %v446, 0.0
        %v449 = vmax.f32 %v447, 0.0
        %v450 = vpack.c.bf16 %v341, %v341
        %v451 = vpack.c.bf16 %v440, %v440
        %v452 = vpack.c.bf16 %v441, %v441
        %453 = vxpose.xlu0.c.b16.start [1/8] %v450, 128
        %454 = vxpose.xlu0.c.b16.cont [2/8] 0, 128
        %455 = vxpose.xlu0.c.b16.cont [3/8] 0, 128
        %456 = vxpose.xlu0.c.b16.cont [4/8] 0, 128
        %457 = vxpose.xlu0.c.b16.cont [5/8] 0, 128
        %458 = vxpose.xlu0.c.b16.cont [6/8] 0, 128
        %459 = vxpose.xlu0.c.b16.cont [7/8] 0, 128
        %460 = vxpose.xlu0.c.b16.end [8/8] 0, 128
        %v461 = vpop.trf.xlu0
        %v462 = vpop.trf.xlu0
        %v463 = vpop.trf.xlu0
        %v464 = vpop.trf.xlu0
        %v465 = vpop.trf.xlu0
        %v466 = vpop.trf.xlu0
        %v467 = vpop.trf.xlu0
        %v468 = vpop.trf.xlu0
        %v470 = vsel %vm357, %v461, 0
        %v473 = vsel %vm361, %v451, 0
        %v476 = vsel %vm361, %v452, 0
        %478 = vmatprep.subr.bf16.mxu0 %v476
        %479 = vmatpush1.bf16.msra.mxu0 %v473
        %480 = vmatprep.subr.bf16.mxu0 0
        %481 = vmatpush1.bf16.msra.mxu0 0
        %482 = vmatprep.subr.bf16.mxu0 0
        %483 = vmatpush1.bf16.msra.mxu0 0
        %484 = vmatprep.subr.bf16.mxu0 0
        %485 = vmatpush1.bf16.msra.mxu0 0
        %486 = vmatprep.subr.bf16.mxu0 0
        %487 = vmatpush1.bf16.msra.mxu0 0
        %488 = vmatprep.subr.bf16.mxu0 0
        %489 = vmatpush1.bf16.msra.mxu0 0
        %490 = vmatprep.subr.bf16.mxu0 0
        %491 = vmatpush1.bf16.msra.mxu0 0
        %492 = vmatprep.subr.bf16.mxu0 0
        %493 = vmatpush1.bf16.msra.mxu0 0
        %494 = vmatprep.subr.bf16.mxu0 0
        %495 = vmatpush1.bf16.msra.mxu0 0
        %496 = vmatprep.subr.bf16.mxu0 0
        %497 = vmatpush1.bf16.msra.mxu0 0
        %498 = vmatprep.subr.bf16.mxu0 0
        %499 = vmatpush1.bf16.msra.mxu0 0
        %500 = vmatprep.subr.bf16.mxu0 0
        %501 = vmatpush1.bf16.msra.mxu0 0
        %502 = vmatprep.subr.bf16.mxu0 0
        %503 = vmatpush1.bf16.msra.mxu0 0
        %504 = vmatprep.subr.bf16.mxu0 0
        %505 = vmatpush1.bf16.msra.mxu0 0
        %506 = vmatprep.subr.bf16.mxu0 0
        %507 = vmatpush1.bf16.msra.mxu0 0
        %508 = vmatprep.subr.bf16.mxu0 0
        %509 = vmatpush1.bf16.msra.mxu0 0
        %510 = vmatprep.mubr.bf16.mxu0 0
        %511 = vmatmul.mubr.bf16.gmra.mrb[0].mxu0 %v470
        %v512 = vpop.f32.mrb[0].mxu0
        %v513 = vadd.f32 0.0, %v512
        %v514 = vpop.f32.mrb[0].mxu0
        %v515 = vadd.f32 0.0, %v514
        %v516 = vpop.f32.mrb[0].mxu0
        %v517 = vpop.f32.mrb[0].mxu0
        %518 = vdwg.mxu0
        %v519 = vmul.f32 %v513, 0.35355338
        %v520 = vmul.f32 %v515, 0.35355338
        %v521 = vrot.slane %v519, 4
        %v522 = vmax.f32 %v519, %v521
        %v523 = vrot.slane %v522, 2
        %v524 = vmax.f32 %v522, %v523
        %v525 = vrot.slane %v524, 1
        %v526 = vmax.f32 %v524, %v525
        %v527 = vrot.slane %v520, 4
        %v528 = vmax.f32 %v520, %v527
        %v529 = vrot.slane %v528, 2
        %v530 = vmax.f32 %v528, %v529
        %v531 = vrot.slane %v530, 1
        %v532 = vmax.f32 %v530, %v531
        %v533 = vsub.f32 %v519, %v526
        %v534 = vsub.f32 %v520, %v532
        %v535 = vmul.f32 %v533, 1.442695
        %v536 = vpow.pop %v535
        %v537 = vmul.f32 %v534, 1.442695
        %v538 = vpow.pop %v537
        %v539 = vrot.slane %v536, 4
        %v540 = vadd.f32 %v536, %v539
        %v541 = vrot.slane %v540, 2
        %v542 = vadd.f32 %v540, %v541
        %v543 = vrot.slane %v542, 1
        %v544 = vadd.f32 %v542, %v543
        %v545 = vrot.slane %v538, 4
        %v546 = vadd.f32 %v538, %v545
        %v547 = vrot.slane %v546, 2
        %v548 = vadd.f32 %v546, %v547
        %v549 = vrot.slane %v548, 1
        %v550 = vadd.f32 %v548, %v549
        %v551 = vrcp.pop %v544
        %v552 = vrcp.pop %v550
        %v553 = vmul.f32 %v536, %v551
        %v554 = vmul.f32 %v538, %v552
        %v555 = vpack.c.bf16 %v346, %v346
        %v556 = vpack.c.bf16 %v553, %v553
        %v557 = vpack.c.bf16 %v554, %v554
        %v559 = vsel %vm357, %v555, 0
        %v562 = vsel %vm361, %v556, 0
        %v565 = vsel %vm361, %v557, 0
        %567 = vmatprep.subr.bf16.mxu0 %v565
        %568 = vmatpush1.bf16.msra.mxu0 %v562
        %569 = vmatprep.subr.bf16.mxu0 0
        %570 = vmatpush1.bf16.msra.mxu0 0
        %571 = vmatprep.subr.bf16.mxu0 0
        %572 = vmatpush1.bf16.msra.mxu0 0
        %573 = vmatprep.subr.bf16.mxu0 0
        %574 = vmatpush1.bf16.msra.mxu0 0
        %575 = vmatprep.subr.bf16.mxu0 0
        %576 = vmatpush1.bf16.msra.mxu0 0
        %577 = vmatprep.subr.bf16.mxu0 0
        %578 = vmatpush1.bf16.msra.mxu0 0
        %579 = vmatprep.subr.bf16.mxu0 0
        %580 = vmatpush1.bf16.msra.mxu0 0
        %581 = vmatprep.subr.bf16.mxu0 0
        %582 = vmatpush1.bf16.msra.mxu0 0
        %583 = vmatprep.subr.bf16.mxu0 0
        %584 = vmatpush1.bf16.msra.mxu0 0
        %585 = vmatprep.subr.bf16.mxu0 0
        %586 = vmatpush1.bf16.msra.mxu0 0
        %587 = vmatprep.subr.bf16.mxu0 0
        %588 = vmatpush1.bf16.msra.mxu0 0
        %589 = vmatprep.subr.bf16.mxu0 0
        %590 = vmatpush1.bf16.msra.mxu0 0
        %591 = vmatprep.subr.bf16.mxu0 0
        %592 = vmatpush1.bf16.msra.mxu0 0
        %593 = vmatprep.subr.bf16.mxu0 0
        %594 = vmatpush1.bf16.msra.mxu0 0
        %595 = vmatprep.subr.bf16.mxu0 0
        %596 = vmatpush1.bf16.msra.mxu0 0
        %597 = vmatprep.subr.bf16.mxu0 0
        %598 = vmatpush1.bf16.msra.mxu0 0
        %599 = vmatprep.mubr.bf16.mxu0 0
        %600 = vmatmul.mubr.bf16.gmra.mrb[0].mxu0 %v559
        %v601 = vpop.f32.mrb[0].mxu0
        %v602 = vadd.f32 0.0, %v601
        %v603 = vpop.f32.mrb[0].mxu0
        %v604 = vadd.f32 0.0, %v603
        %v605 = vpop.f32.mrb[0].mxu0
        %v606 = vpop.f32.mrb[0].mxu0
        %607 = vdwg.mxu0
        %v608 = vadd.f32 %v602, %v604
        %609 = vadd.xlane.f32.xlu0 %v608
        %v610 = vpop.xlane.xlu0 %609
        %v611 = vmul.f32 %v602, %v602
        %v612 = vmul.f32 %v604, %v604
        %v613 = vadd.f32 %v611, %v612
        %614 = vadd.xlane.f32.xlu0 %v613
        %v615 = vpop.xlane.xlu0 %614
        %v616 = vmul.f32 %v610, 0.00390625
        %v617 = vmul.f32 %v615, 0.00390625
        %v618 = vmul.f32 %v616, %v616
        %v619 = vsub.f32 %v617, %v618
        %v620 = vmax.f32 %v619, 0.0
        %v621 = vadd.f32 %v620, 1e-05
        %v622 = vrsqrt.pop %v621
        %v623 = vsub.f32 %v602, %v616
        %v624 = vsub.f32 %v604, %v616
        %v625 = vmul.f32 %v622, %v276
        %627 = vset.pattern.permute.xlu0 6
        %628 = vperm.xlu0 %627, %v625
        %v629 = vpop.permute.xlu0 %628
        %v631 = vmul.f32 %v623, %v629
        %v632 = vmul.f32 %v624, %v629
        %633 = vset.pattern.permute.xlu0 7
        %634 = vperm.xlu0 %633, %v276
        %v635 = vpop.permute.xlu0 %634
        %v637 = vadd.f32 %v631, %v635
        %v638 = vadd.f32 %v632, %v635
        %v639 = vmul.f32 %v448, %v637
        %v640 = vmul.f32 %v449, %v638
        %v641 = vpack.c.bf16 %v639, %v639
        %v642 = vpack.c.bf16 %v640, %v640
        %643 = vset.pattern.permute.xlu0 3
        %644 = vperm.xlu0 %643, %v276
        %v645 = vpop.permute.xlu0 %644
        %v648 = vsel %vm357, %v273, 0
        %v651 = vsel %vm361, %v641, 0
        %v654 = vsel %vm361, %v642, 0
        %656 = vmatprep.subr.bf16.mxu0 %v654
        %657 = vmatpush1.bf16.msra.mxu0 %v651
        %658 = vmatprep.subr.bf16.mxu0 0
        %659 = vmatpush1.bf16.msra.mxu0 0
        %660 = vmatprep.subr.bf16.mxu0 0
        %661 = vmatpush1.bf16.msra.mxu0 0
        %662 = vmatprep.subr.bf16.mxu0 0
        %663 = vmatpush1.bf16.msra.mxu0 0
        %664 = vmatprep.subr.bf16.mxu0 0
        %665 = vmatpush1.bf16.msra.mxu0 0
        %666 = vmatprep.subr.bf16.mxu0 0
        %667 = vmatpush1.bf16.msra.mxu0 0
        %668 = vmatprep.subr.bf16.mxu0 0
        %669 = vmatpush1.bf16.msra.mxu0 0
        %670 = vmatprep.subr.bf16.mxu0 0
        %671 = vmatpush1.bf16.msra.mxu0 0
        %672 = vmatprep.subr.bf16.mxu0 0
        %673 = vmatpush1.bf16.msra.mxu0 0
        %674 = vmatprep.subr.bf16.mxu0 0
        %675 = vmatpush1.bf16.msra.mxu0 0
        %676 = vmatprep.subr.bf16.mxu0 0
        %677 = vmatpush1.bf16.msra.mxu0 0
        %678 = vmatprep.subr.bf16.mxu0 0
        %679 = vmatpush1.bf16.msra.mxu0 0
        %680 = vmatprep.subr.bf16.mxu0 0
        %681 = vmatpush1.bf16.msra.mxu0 0
        %682 = vmatprep.subr.bf16.mxu0 0
        %683 = vmatpush1.bf16.msra.mxu0 0
        %684 = vmatprep.subr.bf16.mxu0 0
        %685 = vmatpush1.bf16.msra.mxu0 0
        %686 = vmatprep.subr.bf16.mxu0 0
        %687 = vmatpush1.bf16.msra.mxu0 0
        %688 = vmatprep.mubr.bf16.mxu0 0
        %689 = vmatmul.mubr.bf16.gmra.mrb[0].mxu0 %v648
        %v690 = vpop.f32.mrb[0].mxu0
        %v691 = vadd.f32 %v645, %v690
        %v692 = vpop.f32.mrb[0].mxu0
        %v693 = vadd.f32 %v645, %v692
        %v694 = vpop.f32.mrb[0].mxu0
        %v695 = vpop.f32.mrb[0].mxu0
        %696 = vdwg.mxu0
        %v697 = vmax.f32 %v691, 0.0
        %v698 = vmax.f32 %v693, 0.0
        %699 = vst [vmem:[%s259] sm:$0xff] %v697
        %700 = vst [vmem:[%s259 + $0x8] sm:$0xff] %v698
        %s701 = sand.u32 %s164, 1
        %s702 = scalar_lea.sflag [#allocation3], %s701
        %s703 = sand.u32 %s164, 1
        %s704 = smul.addr %s703, 16
        %s705 = scalar_lea.vmem [#allocation2], %s704
        // Predicated region
        $region45: #{tpu_custom_call.1} parent=43 // pred_check
          %p706 = pneg %p174
        $region46: #{tpu_custom_call.1} parent=43 // pred_check_branch
          %708 = sbr.rel (%p706) target = $region48
        $region47: #{tpu_custom_call.1} parent=43 // pred_region
          %s710 = ssub.s32 256, 256
          %711 = vsyncadd %s702, %s710
          %s712 = smul.addr %s20, 2
          %s713 = smul.addr %s712, 128
          %s714 = scalar_lea.hbm %s6, %s713
          %s716 = sshll.u32 %s705, 4
          %s717 = int_to_ptr.vmem [resolvable:$true] %s716
          %719 = dma.vmem_to_hbm [thread:$0]  %s717, 256, %s714, %s702
        $region48: #{tpu_custom_call.1} parent=43 // pred_fallthru
          _
      $region44: #{tpu_custom_call.1} parent=5 // pred_fallthru
        _
      %p720 = scmp.le.s32.totalorder 2, %s15
      // Predicated region
      $region49: #{tpu_custom_call.1} parent=5 // pred_check
        %p721 = pneg %p720
      $region50: #{tpu_custom_call.1} parent=5 // pred_check_branch
        %723 = sbr.rel (%p721) target = $region52
      $region51: #{tpu_custom_call.1} parent=5 // pred_region
        %s724 = ssub.s32 %s15, 2
        // Predicated region
        $region53: #{tpu_custom_call.1} parent=51 // pred_check
          %p725 = pneg %p180
        $region54: #{tpu_custom_call.1} parent=51 // pred_check_branch
          %727 = sbr.rel (%p725) target = $region56
        $region55: #{tpu_custom_call.1} parent=51 // pred_region
          %s728 = sand.u32 %s165, 1
          %s729 = scalar_lea.sflag [#allocation3], %s728
          %s730 = sand.u32 %s165, 1
          %s731 = smul.addr %s730, 16
          %s732 = scalar_lea.vmem [#allocation2], %s731
          %733 = dma.done %s729, 256
        $region56: #{tpu_custom_call.1} parent=51 // pred_fallthru
          _
      $region52: #{tpu_custom_call.1} parent=5 // pred_fallthru
        _
    $region6: #{tpu_custom_call.1} parent=1 // loop_footer
      %s19 = sadd.s32 1, %s15
    $region7: #{tpu_custom_call.1} parent=1 // loop_footer_branch
      %14 = sbr.rel target = $region3
    $region8: #{tpu_custom_call.1} parent=1 // loop_exit
      _
    %734 = vsyncpa [#allocation3], 1
    %s735 = scalar_lea.sflag [#allocation3], 1
    %736 = vsyncpa %s735, 1

</llo_original>
